<compile_context>
chip_gen: v7x
topology: tpu7x:2x2x1
jax: 0.10.0
libtpu: 0.0.40
codegen_flags: <defaults>
</compile_context>

<pallas_src>
import jax
import jax.numpy as jnp
from jax.experimental import pallas as pl
from jax.experimental.pallas import tpu as pltpu

TIME_E = 80.0              # simulate_until_max_time(80) / normalization constant
N_NODES = 5                # recs_parser(recs, 5)
N_SIMS = 10                # full module batch: for i in range(10)
SEQ_LEN = 32               # events per sequence // 4 (fixed stand-in length)
L = 4 * SEQ_LEN            # 128 inter-event times per sequence (lane-aligned)
R = N_SIMS * N_NODES * 2   # 100 sequences (arrival + exit per node per sim)
R_PAD = ((R + 7) // 8) * 8 # 104: keep the sublane axis a multiple of 8

assert R_PAD % 8 == 0 and L % 128 == 0


def simunet_kernel(scale_ref, u_ref, o_ref):
    """Fused synthetic-event + recs_parser kernel.

    recs_parser emits first differences of the event-date sequence with dates
    divided by TIME_E; diff(cumsum(gaps)) == gaps, so
        out = gaps / TIME_E = -log(u) / (rate * TIME_E) = -log(u) * scale
    scale_ref[0] = 1 / (rate * TIME_E) lives in SMEM (one scalar, one VPU mul).
    """
    o_ref[...] = -jnp.log(u_ref[...]) * scale_ref[0]   # EUP log + lane-dense vst


def simunet_pallas(scale, uniforms):
    """One pallas_call: (1,) f32 SMEM scalar + (R_PAD, L) uniforms -> (R_PAD, L) diffs."""
    return pl.pallas_call(
        simunet_kernel,
        out_shape=jax.ShapeDtypeStruct((R_PAD, L), jnp.float32),
        in_specs=[pl.BlockSpec(memory_space=pltpu.MemorySpace.SMEM),   # scale
                  pl.BlockSpec((R_PAD, L), lambda: (0, 0))],           # uniforms
        out_specs=pl.BlockSpec((R_PAD, L), lambda: (0, 0)),
        cost_estimate=pl.CostEstimate(
            flops=2 * R_PAD * L,
            transcendentals=R_PAD * L,
            bytes_accessed=2 * R_PAD * L * 4 + 4),
    )(scale, uniforms)


def _draw_uniforms(seed):
    """Deterministic uniform draws in (0, 1) for every sequence of every sim."""
    key = jax.random.PRNGKey(seed)
    return jax.random.uniform(key, (R_PAD, L), dtype=jnp.float32,
                              minval=1e-7, maxval=1.0)      # strictly > 0: no log(0)


def simunet_forward(params, seed):
    """Stand-in for Simunet.forward(seed): one fused kernel covering all 10 sims,
    then repack into the module's nested return structure (per-sim lists of
    (seq_len, 1, 4) tensors)."""
    rate = params[0] + 0.1        # ciw.dists.Exponential(params[0]); +0.1 keeps rate > 0
    scale = (1.0 / (rate * TIME_E)).astype(jnp.float32).reshape(1)
    uniforms = _draw_uniforms(seed)

    diffs_pad = simunet_pallas(scale, uniforms)
    diffs = diffs_pad[:R]                                   # drop sublane padding rows

    # batch = [ per-sim list of 2*N_NODES tensors of shape (seq_len, 1, 4) ]
    seqs = diffs.reshape(N_SIMS, N_NODES * 2, SEQ_LEN, 1, 4)
    batch = [[seqs[s, j] for j in range(N_NODES * 2)] for s in range(N_SIMS)]
    return batch, diffs


if __name__ == "__main__":
    key = jax.random.PRNGKey(0)

    # nn.Parameter(torch.Tensor(8).uniform_(0.0, 1.5)) -- deterministic init
    params = jax.random.uniform(key, (8,), minval=0.0, maxval=1.5,
                                dtype=jnp.float32)

    batch, diffs = simunet_forward(params, seed=0)
    diffs = jax.block_until_ready(diffs)

    # Pure-JAX reference of the fused recs_parser arithmetic on the same draws.
    rate = params[0] + 0.1
    u = _draw_uniforms(0)[:R]
    ref = -jnp.log(u) / (rate * TIME_E)

    assert bool(jnp.all(jnp.isfinite(diffs))), "non-finite output"
    assert bool(jnp.all(diffs >= 0.0)), "negative inter-event time"
    assert jnp.allclose(diffs, ref, atol=1e-7, rtol=1e-4), "kernel mismatch"

    # Structure check: 10 sims, 2*N_NODES sequences each, shape (seq_len, 1, 4)
    assert len(batch) == N_SIMS
    assert all(len(b) == 2 * N_NODES for b in batch)
    assert batch[0][0].shape == (SEQ_LEN, 1, 4)
    assert jnp.allclose(batch[3][2],
                        ref.reshape(N_SIMS, 2 * N_NODES, SEQ_LEN, 1, 4)[3, 2])

    print("KERNEL_OK")
</pallas_src>

<mosaic_0001>
module attributes {stable_mosaic.version = 11 : i64} {
  func.func @simunet_kernel(%arg0: memref<1xf32, #tpu.memory_space<smem>>, %arg1: memref<104x128xf32, #tpu.memory_space<vmem>>, %arg2: memref<104x128xf32, #tpu.memory_space<vmem>>) attributes {dimension_semantics = [], scalar_prefetch = 0 : i64, scratch_operands = 0 : i64, tpu.core_type = #tpu.core_type<tc>} {
    %c0 = arith.constant 0 : index
    %c0_0 = arith.constant 0 : index
    %0 = vector.load %arg1[%c0, %c0_0] : memref<104x128xf32, #tpu.memory_space<vmem>>, vector<104x128xf32>
    %1 = math.log %0 : vector<104x128xf32>
    %cst = arith.constant 0.000000e+00 : f32
    %2 = vector.broadcast %cst : f32 to vector<104x128xf32>
    %3 = arith.subf %2, %1 : vector<104x128xf32>
    %c0_1 = arith.constant 0 : index
    %4 = memref.load %arg0[%c0_1] : memref<1xf32, #tpu.memory_space<smem>>
    %5 = vector.broadcast %4 : f32 to vector<104x128xf32>
    %6 = arith.mulf %3, %5 : vector<104x128xf32>
    %c0_2 = arith.constant 0 : index
    %c0_3 = arith.constant 0 : index
    %7 = vector.load %arg2[%c0_2, %c0_3] : memref<104x128xf32, #tpu.memory_space<vmem>>, vector<104x128xf32>
    tpu.vector_store %arg2[%c0_2, %c0_3], %6 {strides = array<i32>} : memref<104x128xf32, #tpu.memory_space<vmem>>, vector<104x128xf32>,
    return
  }
}

</mosaic_0001>

<llo_original>
// kernel: tpu_custom_call.1
$region0: #{tpu_custom_call.1}
  #allocation0 [shape = 'u32[]', space=smem, size = 0x4, offset = 0x4, fixed_abs, tag = 'smem constant byte address 0x4 - core index']
  #allocation1 [shape = 'u32[144,128]{1,0:T(1,128)}', space=vmem, size = 0x12000, scoped, tag = 'internal scratch']
  #allocation2 [shape = 'f32[1]{0:T(128)S(6)}', space=smem, size = 0x200, scoped, tag = 'scoped memory for tpu_custom_call.1']
  %s0 = inlined_call_operand.<no memory space> [shape: f32[1], index: 0, kind: input, shape index: {}]
  %s1 = inlined_call_operand.hbm [shape: f32[104,128], index: 1, kind: input, shape index: {}]
  %s2 = inlined_call_operand.hbm [shape: f32[104,128], index: 2, kind: output, shape index: {}]
  %s3 = sld [smem:[#allocation0]]
  $region22: #{tpu_custom_call.1} parent=0
    _
  %s5 = ssub.s32 1, %s3
  %s6 = scalar_select 0, %s5, %s3
  %7 = sst [smem:[#allocation2]] %s0
  $region1: #{tpu_custom_call.1} parent=0
    #allocation3 [shape = 'u8[53248]{0}', space=vmem, size = 0xd000, scoped, tag = 'input window, operand 1, single buffered']
    #allocation4 [shape = 's32[1]{0}', space=sflag, size = 0x4, scoped, tag = 'scoped memory for tpu_custom_call.1']
    #allocation5 [shape = 's32[1]{0}', space=sflag, size = 0x4, scoped, tag = 'scoped memory for tpu_custom_call.1']
    #allocation6 [shape = 'u8[53248]{0}', space=vmem, size = 0xd000, scoped, tag = 'output window, operand 0, single buffered']
    %8 = vsyncpa [#allocation4], 0
    %9 = vsyncpa [#allocation5], 0
    // Predicated region
    $region2: #{tpu_custom_call.1} parent=1 // pred_check
      _
    $region3: #{tpu_custom_call.1} parent=1 // pred_check_branch
      %11 = sbr.rel (0) target = $region5
    $region4: #{tpu_custom_call.1} parent=1 // pred_region
      _
    $region5: #{tpu_custom_call.1} parent=1 // pred_fallthru
      _
    // Predicated region
    $region6: #{tpu_custom_call.1} parent=1 // pred_check
      _
    $region7: #{tpu_custom_call.1} parent=1 // pred_check_branch
      %13 = sbr.rel (0) target = $region9
    $region8: #{tpu_custom_call.1} parent=1 // pred_region
      %s15 = ssub.s32 1664, 1664
      %16 = vsyncadd [#allocation4], %s15
      %s17 = sshll.u32 [#allocation3], 4
      %s18 = int_to_ptr.vmem [resolvable:$true] %s17
      %23 = dma.hbm_to_vmem [thread:$0]  %s1, 1664, %s18, [#allocation4], 128, 128, 8
    $region9: #{tpu_custom_call.1} parent=1 // pred_fallthru
      _
    // Predicated region
    $region10: #{tpu_custom_call.1} parent=1 // pred_check
      _
    $region11: #{tpu_custom_call.1} parent=1 // pred_check_branch
      %25 = sbr.rel (0) target = $region13
    $region12: #{tpu_custom_call.1} parent=1 // pred_region
      %26 = dma.done [#allocation4], 1664
    $region13: #{tpu_custom_call.1} parent=1 // pred_fallthru
      _
    %v27 = vld [vmem:[#allocation3] sm:$0xff]
    %v28 = vld [vmem:[#allocation3 + $0x8] sm:$0xff]
    %v29 = vld [vmem:[#allocation3 + $0x10] sm:$0xff]
    %v30 = vld [vmem:[#allocation3 + $0x18] sm:$0xff]
    %v31 = vld [vmem:[#allocation3 + $0x20] sm:$0xff]
    %v32 = vld [vmem:[#allocation3 + $0x28] sm:$0xff]
    %v33 = vld [vmem:[#allocation3 + $0x30] sm:$0xff]
    %v34 = vld [vmem:[#allocation3 + $0x38] sm:$0xff]
    %v35 = vld [vmem:[#allocation3 + $0x40] sm:$0xff]
    %v36 = vld [vmem:[#allocation3 + $0x48] sm:$0xff]
    %v37 = vld [vmem:[#allocation3 + $0x50] sm:$0xff]
    %v38 = vld [vmem:[#allocation3 + $0x58] sm:$0xff]
    %v39 = vld [vmem:[#allocation3 + $0x60] sm:$0xff]
    %v40 = vlog2.pop %v27
    %v41 = vmul.f32 %v40, 0.6931472
    %v42 = vlog2.pop %v28
    %v43 = vmul.f32 %v42, 0.6931472
    %v44 = vlog2.pop %v29
    %v45 = vmul.f32 %v44, 0.6931472
    %v46 = vlog2.pop %v30
    %v47 = vmul.f32 %v46, 0.6931472
    %v48 = vlog2.pop %v31
    %v49 = vmul.f32 %v48, 0.6931472
    %v50 = vlog2.pop %v32
    %v51 = vmul.f32 %v50, 0.6931472
    %v52 = vlog2.pop %v33
    %v53 = vmul.f32 %v52, 0.6931472
    %v54 = vlog2.pop %v34
    %v55 = vmul.f32 %v54, 0.6931472
    %v56 = vlog2.pop %v35
    %v57 = vmul.f32 %v56, 0.6931472
    %v58 = vlog2.pop %v36
    %v59 = vmul.f32 %v58, 0.6931472
    %v60 = vlog2.pop %v37
    %v61 = vmul.f32 %v60, 0.6931472
    %v62 = vlog2.pop %v38
    %v63 = vmul.f32 %v62, 0.6931472
    %v64 = vlog2.pop %v39
    %v65 = vmul.f32 %v64, 0.6931472
    %v66 = vsub.f32 0.0, %v41
    %v67 = vsub.f32 0.0, %v43
    %v68 = vsub.f32 0.0, %v45
    %v69 = vsub.f32 0.0, %v47
    %v70 = vsub.f32 0.0, %v49
    %v71 = vsub.f32 0.0, %v51
    %v72 = vsub.f32 0.0, %v53
    %v73 = vsub.f32 0.0, %v55
    %v74 = vsub.f32 0.0, %v57
    %v75 = vsub.f32 0.0, %v59
    %v76 = vsub.f32 0.0, %v61
    %v77 = vsub.f32 0.0, %v63
    %v78 = vsub.f32 0.0, %v65
    %s79 = sld [smem:[#allocation2]]
    %v80 = vstv %s79
    %v81 = vmul.f32 %v66, %v80
    %v82 = vmul.f32 %v67, %v80
    %v83 = vmul.f32 %v68, %v80
    %v84 = vmul.f32 %v69, %v80
    %v85 = vmul.f32 %v70, %v80
    %v86 = vmul.f32 %v71, %v80
    %v87 = vmul.f32 %v72, %v80
    %v88 = vmul.f32 %v73, %v80
    %v89 = vmul.f32 %v74, %v80
    %v90 = vmul.f32 %v75, %v80
    %v91 = vmul.f32 %v76, %v80
    %v92 = vmul.f32 %v77, %v80
    %v93 = vmul.f32 %v78, %v80
    %94 = vst [vmem:[#allocation6] sm:$0xff] %v81
    %95 = vst [vmem:[#allocation6 + $0x8] sm:$0xff] %v82
    %96 = vst [vmem:[#allocation6 + $0x10] sm:$0xff] %v83
    %97 = vst [vmem:[#allocation6 + $0x18] sm:$0xff] %v84
    %98 = vst [vmem:[#allocation6 + $0x20] sm:$0xff] %v85
    %99 = vst [vmem:[#allocation6 + $0x28] sm:$0xff] %v86
    %100 = vst [vmem:[#allocation6 + $0x30] sm:$0xff] %v87
    %101 = vst [vmem:[#allocation6 + $0x38] sm:$0xff] %v88
    %102 = vst [vmem:[#allocation6 + $0x40] sm:$0xff] %v89
    %103 = vst [vmem:[#allocation6 + $0x48] sm:$0xff] %v90
    %104 = vst [vmem:[#allocation6 + $0x50] sm:$0xff] %v91
    %105 = vst [vmem:[#allocation6 + $0x58] sm:$0xff] %v92
    %106 = vst [vmem:[#allocation6 + $0x60] sm:$0xff] %v93
    // Predicated region
    $region14: #{tpu_custom_call.1} parent=1 // pred_check
      _
    $region15: #{tpu_custom_call.1} parent=1 // pred_check_branch
      %108 = sbr.rel (0) target = $region17
    $region16: #{tpu_custom_call.1} parent=1 // pred_region
      %s110 = ssub.s32 1664, 1664
      %111 = vsyncadd [#allocation5], %s110
      %s112 = sshll.u32 [#allocation6], 4
      %s113 = int_to_ptr.vmem [resolvable:$true] %s112
      %118 = dma.vmem_to_hbm [thread:$0]  %s113, 1664, %s2, [#allocation5], 128, 128, 8
    $region17: #{tpu_custom_call.1} parent=1 // pred_fallthru
      _
    // Predicated region
    $region18: #{tpu_custom_call.1} parent=1 // pred_check
      _
    $region19: #{tpu_custom_call.1} parent=1 // pred_check_branch
      %120 = sbr.rel (0) target = $region21
    $region20: #{tpu_custom_call.1} parent=1 // pred_region
      %121 = dma.done [#allocation5], 1664
    $region21: #{tpu_custom_call.1} parent=1 // pred_fallthru
      _
    %122 = vsyncpa [#allocation4], 1
    %123 = vsyncpa [#allocation5], 1

</llo_original>
